<compile_context>
chip_gen: v7x
topology: tpu7x:2x2x1
jax: 0.10.0
libtpu: 0.0.40
codegen_flags: <defaults>
</compile_context>

<pallas_src>
import math

import jax
import jax.numpy as jnp
from jax.experimental import pallas as pl
from jax.experimental.pallas import tpu as pltpu


_LANES = 512        # lane-dense last dim (multiple of 128)
_TM_TARGET = 1024   # rows per tile -> 1024*512*4B = 2 MiB per f32 input tile
_NUM_SPLITS = 2     # leading "parallel" grid axis (both TensorCores on v7x)


def _round_up(x: int, m: int) -> int:
    return ((x + m - 1) // m) * m


def _make_grid_cell_loss_kernel(tm: int, lanes: int):
    def kernel(gen_ref, tgt_ref, out_ref):
        i = pl.program_id(1)

        @pl.when(i == 0)
        def _init():
            out_ref[...] = jnp.zeros_like(out_ref)

        g = gen_ref[...].astype(jnp.float32)
        t = tgt_ref[...].astype(jnp.float32)
        # NOTE: the PyTorch reference hardcodes the clip ceiling to 24.0 and
        # ignores self.precip_weight_cap; we reproduce that behaviour exactly.
        w = jnp.clip(t + 1.0, 0.0, 24.0)
        contrib = jnp.abs((g - t) * w)
        # VPU-only accumulation: fold sublane groups of the (tm, lanes) tile
        # into the resident (8, lanes) output block. The single cross-lane
        # reduce and the divide happen once, in the wrapper.
        out_ref[...] += jnp.sum(contrib.reshape(tm // 8, 8, lanes), axis=0)

    return kernel


def grid_cell_loss(generated_images: jax.Array,
                   targets: jax.Array,
                   precip_weight_cap: float = 24.0) -> jax.Array:
    """Pallas implementation of GridCellLoss.forward. Returns a scalar f32."""
    # precip_weight_cap is accepted for API parity but (like the PyTorch
    # reference) the clip ceiling is hardcoded to 24.0.
    assert generated_images.shape == targets.shape
    n = math.prod(generated_images.shape)

    # Keep native dtype (bf16 stays bf16 -> half the HBM traffic); cast in-kernel.
    gen_flat = generated_images.reshape(-1)
    tgt_flat = targets.reshape(-1)

    lanes = _LANES
    rows_needed = pl.cdiv(n, lanes)
    tm = min(_TM_TARGET, _round_up(rows_needed, 8))
    rows_padded = _round_up(rows_needed, _NUM_SPLITS * tm)
    pad = rows_padded * lanes - n
    if pad:
        # Zero padding contributes exactly 0 to the sum; divide by true n below.
        gen_flat = jnp.pad(gen_flat, (0, pad))
        tgt_flat = jnp.pad(tgt_flat, (0, pad))

    gen2d = gen_flat.reshape(rows_padded, lanes)
    tgt2d = tgt_flat.reshape(rows_padded, lanes)

    steps = rows_padded // (_NUM_SPLITS * tm)
    grid = (_NUM_SPLITS, steps)

    kernel = _make_grid_cell_loss_kernel(tm, lanes)

    partials = pl.pallas_call(
        kernel,
        out_shape=jax.ShapeDtypeStruct((_NUM_SPLITS * 8, lanes), jnp.float32),
        grid_spec=pltpu.PrefetchScalarGridSpec(
            num_scalar_prefetch=0,
            grid=grid,
            in_specs=[
                pl.BlockSpec((tm, lanes), lambda c, i: (c * steps + i, 0)),
                pl.BlockSpec((tm, lanes), lambda c, i: (c * steps + i, 0)),
            ],
            # Per-core resident accumulator block: index depends only on the
            # parallel axis, so it stays in VMEM across the reduction axis.
            out_specs=pl.BlockSpec((8, lanes), lambda c, i: (c, 0)),
        ),
        compiler_params=pltpu.CompilerParams(
            dimension_semantics=("parallel", "arbitrary"),
            vmem_limit_bytes=32 * 1024 * 1024,
        ),
    )(gen2d, tgt2d)

    return jnp.sum(partials) / float(n)


def grid_cell_loss_ref(generated_images, targets):
    """Pure-JAX reference mirroring the PyTorch forward."""
    g = generated_images.astype(jnp.float32)
    t = targets.astype(jnp.float32)
    weights = jnp.clip(t + 1.0, 0.0, 24.0)
    return jnp.mean(jnp.abs((g - t) * weights))


if __name__ == "__main__":
    key = jax.random.PRNGKey(0)
    k1, k2, k3, k4 = jax.random.split(key, 4)

    # Shape implied by the module's intended use (B, C, H, W).
    B, C, H, W = 2, 4, 16, 16
    generated = jax.random.normal(k1, (B, C, H, W), dtype=jnp.float32)
    # targets in a precip-like non-negative range so the clip is exercised
    targets = 30.0 * jax.random.uniform(k2, (B, C, H, W), dtype=jnp.float32)

    loss = jax.block_until_ready(grid_cell_loss(generated, targets))
    ref = grid_cell_loss_ref(generated, targets)
    assert jnp.allclose(loss, ref, rtol=1e-5, atol=1e-5), (loss, ref)

    # Awkward, non-tile-aligned shape to exercise the zero-padding path.
    g2 = jax.random.normal(k3, (2, 3, 17, 23), dtype=jnp.float32)
    t2 = 30.0 * jax.random.uniform(k4, (2, 3, 17, 23), dtype=jnp.float32)
    loss2 = jax.block_until_ready(grid_cell_loss(g2, t2))
    ref2 = grid_cell_loss_ref(g2, t2)
    assert jnp.allclose(loss2, ref2, rtol=1e-5, atol=1e-5), (loss2, ref2)

    print("KERNEL_OK")
</pallas_src>

<mosaic_0001>
module attributes {stable_mosaic.version = 11 : i64} {
  func.func @kernel(%arg0: i32, %arg1: i32, %arg2: memref<8x512xf32, #tpu.memory_space<vmem>>, %arg3: memref<8x512xf32, #tpu.memory_space<vmem>>, %arg4: memref<8x512xf32, #tpu.memory_space<vmem>>) attributes {dimension_semantics = [#tpu.dimension_semantics<parallel>, #tpu.dimension_semantics<arbitrary>], iteration_bounds = array<i64: 2, 1>, scalar_prefetch = 0 : i64, scratch_operands = 0 : i64, tpu.core_type = #tpu.core_type<tc>, window_params = [{transform_indices = @transform_0, window_bounds = array<i64: 8, 512>}, {transform_indices = @transform_1, window_bounds = array<i64: 8, 512>}, {transform_indices = @transform_2, window_bounds = array<i64: 8, 512>}]} {
    %c0_i32 = arith.constant 0 : i32
    %0 = arith.cmpi eq, %arg1, %c0_i32 : i32
    %1 = arith.extui %0 : i1 to i32
    %c0_i32_0 = arith.constant 0 : i32
    %2 = arith.cmpi ne, %1, %c0_i32_0 : i32
    scf.if %2 {
      %cst_11 = arith.constant 0.000000e+00 : f32
      %19 = vector.broadcast %cst_11 : f32 to vector<8x512xf32>
      %c0_12 = arith.constant 0 : index
      %c0_13 = arith.constant 0 : index
      %20 = vector.load %arg4[%c0_12, %c0_13] : memref<8x512xf32, #tpu.memory_space<vmem>>, vector<8x512xf32>
      tpu.vector_store %arg4[%c0_12, %c0_13], %19 {strides = array<i32>} : memref<8x512xf32, #tpu.memory_space<vmem>>, vector<8x512xf32>,
    } else {
    }
    %c0 = arith.constant 0 : index
    %c0_1 = arith.constant 0 : index
    %3 = vector.load %arg2[%c0, %c0_1] : memref<8x512xf32, #tpu.memory_space<vmem>>, vector<8x512xf32>
    %c0_2 = arith.constant 0 : index
    %c0_3 = arith.constant 0 : index
    %4 = vector.load %arg3[%c0_2, %c0_3] : memref<8x512xf32, #tpu.memory_space<vmem>>, vector<8x512xf32>
    %cst = arith.constant 1.000000e+00 : f32
    %5 = vector.broadcast %cst : f32 to vector<8x512xf32>
    %6 = arith.addf %4, %5 : vector<8x512xf32>
    %cst_4 = arith.constant 0.000000e+00 : f32
    %cst_5 = arith.constant 2.400000e+01 : f32
    %7 = vector.broadcast %cst_4 : f32 to vector<8x512xf32>
    %8 = arith.maximumf %7, %6 : vector<8x512xf32>
    %9 = vector.broadcast %cst_5 : f32 to vector<8x512xf32>
    %10 = arith.minimumf %9, %8 : vector<8x512xf32>
    %11 = arith.subf %3, %4 : vector<8x512xf32>
    %12 = arith.mulf %11, %10 : vector<8x512xf32>
    %13 = math.absf %12 : vector<8x512xf32>
    %c0_6 = arith.constant 0 : index
    %c0_7 = arith.constant 0 : index
    %14 = vector.load %arg4[%c0_6, %c0_7] : memref<8x512xf32, #tpu.memory_space<vmem>>, vector<8x512xf32>
    %15 = vector.shape_cast %13 : vector<8x512xf32> to vector<1x8x512xf32>
    %cst_8 = arith.constant dense<0.000000e+00> : vector<8x512xf32>
    %16 = vector.multi_reduction <add>, %15, %cst_8 [0] : vector<1x8x512xf32> to vector<8x512xf32>
    %17 = arith.addf %14, %16 : vector<8x512xf32>
    %c0_9 = arith.constant 0 : index
    %c0_10 = arith.constant 0 : index
    %18 = vector.load %arg4[%c0_9, %c0_10] : memref<8x512xf32, #tpu.memory_space<vmem>>, vector<8x512xf32>
    tpu.vector_store %arg4[%c0_9, %c0_10], %17 {strides = array<i32>} : memref<8x512xf32, #tpu.memory_space<vmem>>, vector<8x512xf32>,
    return
  }
  func.func @transform_0(%arg0: i32, %arg1: i32) -> (i32, i32) {
    %c1_i32 = arith.constant 1 : i32
    %0 = arith.muli %arg0, %c1_i32 : i32
    %1 = arith.addi %0, %arg1 : i32
    %c0_i32 = arith.constant 0 : i32
    %c0_i32_0 = arith.constant 0 : i32
    return %1, %c0_i32 : i32, i32
  }
  func.func @transform_1(%arg0: i32, %arg1: i32) -> (i32, i32) {
    %c1_i32 = arith.constant 1 : i32
    %0 = arith.muli %arg0, %c1_i32 : i32
    %1 = arith.addi %0, %arg1 : i32
    %c0_i32 = arith.constant 0 : i32
    %c0_i32_0 = arith.constant 0 : i32
    return %1, %c0_i32 : i32, i32
  }
  func.func @transform_2(%arg0: i32, %arg1: i32) -> (i32, i32) {
    %c0_i32 = arith.constant 0 : i32
    %c0_i32_0 = arith.constant 0 : i32
    return %arg0, %c0_i32 : i32, i32
  }
}

</mosaic_0001>

<llo_original>
// kernel: tpu_custom_call.1
$region0: #{tpu_custom_call.1}
  #allocation0 [shape = 'u32[]', space=smem, size = 0x4, offset = 0x4, fixed_abs, tag = 'smem constant byte address 0x4 - core index']
  #allocation1 [shape = 'u32[144,128]{1,0:T(1,128)}', space=vmem, size = 0x12000, scoped, tag = 'internal scratch']
  %s0 = inlined_call_operand.hbm [shape: f32[16,512], index: 0, kind: input, shape index: {}]
  %s1 = inlined_call_operand.hbm [shape: f32[16,512], index: 1, kind: input, shape index: {}]
  %s2 = inlined_call_operand.hbm [shape: f32[16,512], index: 2, kind: output, shape index: {}]
  %s3 = sld [smem:[#allocation0]]
  $region53: #{tpu_custom_call.1} parent=0
    _
  %s5 = ssub.s32 1, %s3
  %s6 = scalar_select 0, %s5, %s3
  $region1: #{tpu_custom_call.1} parent=0
    #allocation2 [shape = 'u8[32768]{0}', space=vmem, size = 0x8000, scoped, tag = 'input window, operand 0']
    #allocation3 [shape = 's32[2]{0}', space=sflag, size = 0x8, scoped, tag = 'scoped memory for tpu_custom_call.1']
    #allocation4 [shape = 's32[2]{0}', space=sflag, size = 0x8, scoped, tag = 'scoped memory for tpu_custom_call.1']
    #allocation5 [shape = 'u8[32768]{0}', space=vmem, size = 0x8000, scoped, tag = 'input window, operand 1']
    #allocation6 [shape = 's32[2]{0}', space=sflag, size = 0x8, scoped, tag = 'scoped memory for tpu_custom_call.1']
    #allocation7 [shape = 'u8[32768]{0}', space=vmem, size = 0x8000, scoped, tag = 'output window, operand 0']
    %7 = vsyncpa [#allocation3], 0
    %s8 = scalar_lea.sflag [#allocation3], 1
    %9 = vsyncpa %s8, 0
    %10 = vsyncpa [#allocation6], 0
    %s11 = scalar_lea.sflag [#allocation6], 1
    %12 = vsyncpa %s11, 0
    %13 = vsyncpa [#allocation4], 0
    %s14 = scalar_lea.sflag [#allocation4], 1
    %15 = vsyncpa %s14, 0
    loop: start=0, step=1, limit=4
    $region2: #{tpu_custom_call.1} parent=1 // loop_pre_header
      _
    $region3: #{tpu_custom_call.1} parent=1 // loop_header
      %s17 = sphi 0, %s21
      %p18 = scmp.ge.s32.totalorder %s17, 4
      %s24 = sphi 0, %s36
      %s25 = sphi 0, %s32
      %s26 = sphi 0, %s24
      %s27 = sphi 0, %s25
      %s28 = sphi 0, %s26
      %s29 = sphi 0, %s27
      %s41 = sphi 0, %s43
      %s44 = sphi 0, %s41
      %s45 = sphi 0, %s44
      %s61 = sphi 0, %s45
      %s69 = sphi 0, %s71
      %s72 = sphi 0, %s69
      %s73 = sphi 0, %s72
      %s89 = sphi 0, %s73
      %s95 = sphi 0, %s97
      %s98 = sphi 0, %s95
      %s99 = sphi 0, %s98
      %s115 = sphi 0, %s99
    $region4: #{tpu_custom_call.1} parent=1 // loop_header_branch
      %20 = sbr.rel (%p18) target = $region8
    $region5: #{tpu_custom_call.1} parent=1 // loop_body
      %s22 = ssub.s32 %s17, 1
      %s23 = ssub.s32 %s17, 2
      %s30 = sadd.s32 1, %s25
      %p31 = scmp.ge.s32.totalorder %s30, 1
      %s32 = scalar_select %p31, 0, %s30
      %s33 = sadd.s32 1, %s24
      %s34 = scalar_select %p31, %s33, %s24
      %p35 = scmp.ge.s32.totalorder %s34, 2
      %s36 = scalar_select %p35, 0, %s34
      %s37 = sadd.s32 %s24, %s25
      %s38 = sadd.s32 %s36, %s32
      %s39 = ssub.s32 %s37, %s38
      %p40 = scmp.eq.s32.totalorder %s39, 0
      %s42 = sadd.s32 %s41, 1
      %s43 = scalar_select %p40, %s41, %s42
      %p46 = pneg %p40
      %p47 = scmp.eq.s32.totalorder %s17, 1
      %p48 = por %p46, %p47
      %p49 = scmp.ne.s32.totalorder %s41, %s44
      %p50 = scmp.eq.s32.totalorder %s17, 0
      %p51 = por %p49, %p50
      %p52 = scmp.ne.s32.totalorder %s41, %s44
      %p53 = scmp.eq.s32.totalorder %s22, 1
      %p54 = por %p52, %p53
      %p55 = scmp.ne.s32.totalorder %s44, %s45
      %p56 = scmp.eq.s32.totalorder %s22, 0
      %p57 = por %p55, %p56
      %p58 = scmp.ne.s32.totalorder %s44, %s45
      %p59 = scmp.eq.s32.totalorder %s23, 1
      %p60 = por %p58, %p59
      %p62 = scmp.ne.s32.totalorder %s45, %s61
      %p63 = scmp.eq.s32.totalorder %s23, 0
      %p64 = por %p62, %p63
      %s65 = sadd.s32 %s24, %s25
      %s66 = sadd.s32 %s36, %s32
      %s67 = ssub.s32 %s65, %s66
      %p68 = scmp.eq.s32.totalorder %s67, 0
      %s70 = sadd.s32 %s69, 1
      %s71 = scalar_select %p68, %s69, %s70
      %p74 = pneg %p68
      %p75 = scmp.eq.s32.totalorder %s17, 1
      %p76 = por %p74, %p75
      %p77 = scmp.ne.s32.totalorder %s69, %s72
      %p78 = scmp.eq.s32.totalorder %s17, 0
      %p79 = por %p77, %p78
      %p80 = scmp.ne.s32.totalorder %s69, %s72
      %p81 = scmp.eq.s32.totalorder %s22, 1
      %p82 = por %p80, %p81
      %p83 = scmp.ne.s32.totalorder %s72, %s73
      %p84 = scmp.eq.s32.totalorder %s22, 0
      %p85 = por %p83, %p84
      %p86 = scmp.ne.s32.totalorder %s72, %s73
      %p87 = scmp.eq.s32.totalorder %s23, 1
      %p88 = por %p86, %p87
      %p90 = scmp.ne.s32.totalorder %s73, %s89
      %p91 = scmp.eq.s32.totalorder %s23, 0
      %p92 = por %p90, %p91
      %s93 = ssub.s32 %s24, %s36
      %p94 = scmp.eq.s32.totalorder %s93, 0
      %s96 = sadd.s32 %s95, 1
      %s97 = scalar_select %p94, %s95, %s96
      %p100 = pneg %p94
      %p101 = scmp.eq.s32.totalorder %s17, 1
      %p102 = por %p100, %p101
      %p103 = scmp.ne.s32.totalorder %s95, %s98
      %p104 = scmp.eq.s32.totalorder %s17, 0
      %p105 = por %p103, %p104
      %p106 = scmp.ne.s32.totalorder %s95, %s98
      %p107 = scmp.eq.s32.totalorder %s22, 1
      %p108 = por %p106, %p107
      %p109 = scmp.ne.s32.totalorder %s98, %s99
      %p110 = scmp.eq.s32.totalorder %s22, 0
      %p111 = por %p109, %p110
      %p112 = scmp.ne.s32.totalorder %s98, %s99
      %p113 = scmp.eq.s32.totalorder %s23, 1
      %p114 = por %p112, %p113
      %p116 = scmp.ne.s32.totalorder %s99, %s115
      %p117 = scmp.eq.s32.totalorder %s23, 0
      %p118 = por %p116, %p117
      %p119 = scmp.le.s32.totalorder 1, %s17
      %p120 = scmp.lt.s32.totalorder %s17, 3
      %p121 = pnand %p119, %p120
      %p122 = pneg %p121
      // Predicated region
      $region9: #{tpu_custom_call.1} parent=5 // pred_check
        _
      $region10: #{tpu_custom_call.1} parent=5 // pred_check_branch
        %124 = sbr.rel (%p121) target = $region12
      $region11: #{tpu_custom_call.1} parent=5 // pred_region
        %s125 = ssub.s32 %s17, 1
      $region12: #{tpu_custom_call.1} parent=5 // pred_fallthru
        _
      %p126 = scmp.lt.s32.totalorder %s17, 2
      // Predicated region
      $region13: #{tpu_custom_call.1} parent=5 // pred_check
        %p127 = pneg %p126
      $region14: #{tpu_custom_call.1} parent=5 // pred_check_branch
        %129 = sbr.rel (%p127) target = $region16
      $region15: #{tpu_custom_call.1} parent=5 // pred_region
        // Predicated region
        $region17: #{tpu_custom_call.1} parent=15 // pred_check
          %p130 = pneg %p51
        $region18: #{tpu_custom_call.1} parent=15 // pred_check_branch
          %132 = sbr.rel (%p130) target = $region20
        $region19: #{tpu_custom_call.1} parent=15 // pred_region
          %s133 = sand.u32 %s41, 1
          %s134 = scalar_lea.sflag [#allocation3], %s133
          %s135 = sand.u32 %s41, 1
          %s136 = smul.addr %s135, 32
          %s137 = scalar_lea.vmem [#allocation2], %s136
          %s138 = sadd.s32 %s24, %s25
          %s140 = ssub.s32 512, 512
          %141 = vsyncadd %s134, %s140
          %s142 = smul.addr %s138, 4
          %s143 = smul.addr %s142, 128
          %s144 = scalar_lea.hbm %s0, %s143
          %s146 = sshll.u32 %s137, 4
          %s147 = int_to_ptr.vmem [resolvable:$true] %s146
          %149 = dma.hbm_to_vmem [thread:$0]  %s144, 512, %s147, %s134
        $region20: #{tpu_custom_call.1} parent=15 // pred_fallthru
          _
        // Predicated region
        $region21: #{tpu_custom_call.1} parent=15 // pred_check
          %p150 = pneg %p79
        $region22: #{tpu_custom_call.1} parent=15 // pred_check_branch
          %152 = sbr.rel (%p150) target = $region24
        $region23: #{tpu_custom_call.1} parent=15 // pred_region
          %s153 = sand.u32 %s69, 1
          %s154 = scalar_lea.sflag [#allocation6], %s153
          %s155 = sand.u32 %s69, 1
          %s156 = smul.addr %s155, 32
          %s157 = scalar_lea.vmem [#allocation5], %s156
          %s158 = sadd.s32 %s24, %s25
          %s160 = ssub.s32 512, 512
          %161 = vsyncadd %s154, %s160
          %s162 = smul.addr %s158, 4
          %s163 = smul.addr %s162, 128
          %s164 = scalar_lea.hbm %s1, %s163
          %s166 = sshll.u32 %s157, 4
          %s167 = int_to_ptr.vmem [resolvable:$true] %s166
          %169 = dma.hbm_to_vmem [thread:$0]  %s164, 512, %s167, %s154
        $region24: #{tpu_custom_call.1} parent=15 // pred_fallthru
          _
      $region16: #{tpu_custom_call.1} parent=5 // pred_fallthru
        _
      %p170 = scmp.le.s32.totalorder 1, %s17
      %p171 = scmp.lt.s32.totalorder %s17, 3
      %p172 = pnand %p170, %p171
      %p173 = pneg %p172
      // Predicated region
      $region25: #{tpu_custom_call.1} parent=5 // pred_check
        _
      $region26: #{tpu_custom_call.1} parent=5 // pred_check_branch
        %175 = sbr.rel (%p172) target = $region28
      $region27: #{tpu_custom_call.1} parent=5 // pred_region
        %s176 = ssub.s32 %s17, 1
        %s177 = sand.u32 %s44, 1
        %s178 = scalar_lea.sflag [#allocation3], %s177
        %s179 = sand.u32 %s44, 1
        %s180 = smul.addr %s179, 32
        %s181 = scalar_lea.vmem [#allocation2], %s180
        // Predicated region
        $region29: #{tpu_custom_call.1} parent=27 // pred_check
          %p182 = pneg %p57
        $region30: #{tpu_custom_call.1} parent=27 // pred_check_branch
          %184 = sbr.rel (%p182) target = $region32
        $region31: #{tpu_custom_call.1} parent=27 // pred_region
          %185 = dma.done %s178, 512
        $region32: #{tpu_custom_call.1} parent=27 // pred_fallthru
          _
        %s186 = sand.u32 %s72, 1
        %s187 = scalar_lea.sflag [#allocation6], %s186
        %s188 = sand.u32 %s72, 1
        %s189 = smul.addr %s188, 32
        %s190 = scalar_lea.vmem [#allocation5], %s189
        // Predicated region
        $region33: #{tpu_custom_call.1} parent=27 // pred_check
          %p191 = pneg %p85
        $region34: #{tpu_custom_call.1} parent=27 // pred_check_branch
          %193 = sbr.rel (%p191) target = $region36
        $region35: #{tpu_custom_call.1} parent=27 // pred_region
          %194 = dma.done %s187, 512
        $region36: #{tpu_custom_call.1} parent=27 // pred_fallthru
          _
        %s195 = sand.u32 %s44, 1
        %s196 = scalar_lea.sflag [#allocation3], %s195
        %s197 = sand.u32 %s44, 1
        %s198 = smul.addr %s197, 32
        %s199 = scalar_lea.vmem [#allocation2], %s198
        %p200 = pneg %p57
        %p201 = pneg %p54
        %s202 = sand.u32 %s72, 1
        %s203 = scalar_lea.sflag [#allocation6], %s202
        %s204 = sand.u32 %s72, 1
        %s205 = smul.addr %s204, 32
        %s206 = scalar_lea.vmem [#allocation5], %s205
        %p207 = pneg %p85
        %p208 = pneg %p82
        %p209 = pneg %p111
        %p210 = pneg %p108
        %s211 = sand.u32 %s98, 1
        %s212 = scalar_lea.sflag [#allocation4], %s211
        %s213 = sand.u32 %s98, 1
        %s214 = smul.addr %s213, 32
        %s215 = scalar_lea.vmem [#allocation7], %s214
        %s216 = sadd.s32 %s26, %s27
        %s217 = sadd.s32 %s26, %s27
        %p218 = scmp.eq.s32.totalorder %s27, 0
        // Predicated region
        $region37: #{tpu_custom_call.1} parent=27 // pred_check
          %p219 = pneg %p218
        $region38: #{tpu_custom_call.1} parent=27 // pred_check_branch
          %221 = sbr.rel (%p219) target = $region40
        $region39: #{tpu_custom_call.1} parent=27 // pred_region
          %222 = vst [vmem:[%s215] sm:$0xff] 0.0
          %223 = vst [vmem:[%s215 + $0x8] sm:$0xff] 0.0
          %224 = vst [vmem:[%s215 + $0x10] sm:$0xff] 0.0
          %225 = vst [vmem:[%s215 + $0x18] sm:$0xff] 0.0
        $region40: #{tpu_custom_call.1} parent=27 // pred_fallthru
          _
        %v226 = vld [vmem:[%s181] sm:$0xff]
        %v227 = vld [vmem:[%s181 + $0x8] sm:$0xff]
        %v228 = vld [vmem:[%s181 + $0x10] sm:$0xff]
        %v229 = vld [vmem:[%s181 + $0x18] sm:$0xff]
        %v230 = vld [vmem:[%s190] sm:$0xff]
        %v231 = vld [vmem:[%s190 + $0x8] sm:$0xff]
        %v232 = vld [vmem:[%s190 + $0x10] sm:$0xff]
        %v233 = vld [vmem:[%s190 + $0x18] sm:$0xff]
        %v234 = vadd.f32 %v230, 1.0
        %v235 = vadd.f32 %v231, 1.0
        %v236 = vadd.f32 %v232, 1.0
        %v237 = vadd.f32 %v233, 1.0
        %v238 = vmax.f32 %v234, 0.0
        %v239 = vmax.f32 %v235, 0.0
        %v240 = vmax.f32 %v236, 0.0
        %v241 = vmax.f32 %v237, 0.0
        %v242 = vmin.f32 %v238, 24.0
        %v243 = vmin.f32 %v239, 24.0
        %v244 = vmin.f32 %v240, 24.0
        %v245 = vmin.f32 %v241, 24.0
        %v246 = vsub.f32 %v226, %v230
        %v247 = vsub.f32 %v227, %v231
        %v248 = vsub.f32 %v228, %v232
        %v249 = vsub.f32 %v229, %v233
        %v250 = vmul.f32 %v246, %v242
        %v251 = vmul.f32 %v247, %v243
        %v252 = vmul.f32 %v248, %v244
        %v253 = vmul.f32 %v249, %v245
        %v254 = vand.u32 2147483647, %v250
        %v255 = vand.u32 2147483647, %v251
        %v256 = vand.u32 2147483647, %v252
        %v257 = vand.u32 2147483647, %v253
        %v258 = vld [vmem:[%s215] sm:$0xff]
        %v259 = vld [vmem:[%s215 + $0x8] sm:$0xff]
        %v260 = vld [vmem:[%s215 + $0x10] sm:$0xff]
        %v261 = vld [vmem:[%s215 + $0x18] sm:$0xff]
        %v262 = vadd.f32 %v254, 0.0
        %v263 = vadd.f32 %v255, 0.0
        %v264 = vadd.f32 %v256, 0.0
        %v265 = vadd.f32 %v257, 0.0
        %v266 = vadd.f32 %v258, %v262
        %v267 = vadd.f32 %v259, %v263
        %v268 = vadd.f32 %v260, %v264
        %v269 = vadd.f32 %v261, %v265
        %270 = vst [vmem:[%s215] sm:$0xff] %v266
        %271 = vst [vmem:[%s215 + $0x8] sm:$0xff] %v267
        %272 = vst [vmem:[%s215 + $0x10] sm:$0xff] %v268
        %273 = vst [vmem:[%s215 + $0x18] sm:$0xff] %v269
        %s274 = sand.u32 %s98, 1
        %s275 = scalar_lea.sflag [#allocation4], %s274
        %s276 = sand.u32 %s98, 1
        %s277 = smul.addr %s276, 32
        %s278 = scalar_lea.vmem [#allocation7], %s277
        // Predicated region
        $region41: #{tpu_custom_call.1} parent=27 // pred_check
          %p279 = pneg %p108
        $region42: #{tpu_custom_call.1} parent=27 // pred_check_branch
          %281 = sbr.rel (%p279) target = $region44
        $region43: #{tpu_custom_call.1} parent=27 // pred_region
          %s283 = ssub.s32 512, 512
          %284 = vsyncadd %s275, %s283
          %s285 = smul.addr %s26, 4
          %s286 = smul.addr %s285, 128
          %s287 = scalar_lea.hbm %s2, %s286
          %s289 = sshll.u32 %s278, 4
          %s290 = int_to_ptr.vmem [resolvable:$true] %s289
          %292 = dma.vmem_to_hbm [thread:$0]  %s290, 512, %s287, %s275
        $region44: #{tpu_custom_call.1} parent=27 // pred_fallthru
          _
      $region28: #{tpu_custom_call.1} parent=5 // pred_fallthru
        _
      %p293 = scmp.le.s32.totalorder 2, %s17
      // Predicated region
      $region45: #{tpu_custom_call.1} parent=5 // pred_check
        %p294 = pneg %p293
      $region46: #{tpu_custom_call.1} parent=5 // pred_check_branch
        %296 = sbr.rel (%p294) target = $region48
      $region47: #{tpu_custom_call.1} parent=5 // pred_region
        %s297 = ssub.s32 %s17, 2
        // Predicated region
        $region49: #{tpu_custom_call.1} parent=47 // pred_check
          %p298 = pneg %p114
        $region50: #{tpu_custom_call.1} parent=47 // pred_check_branch
          %300 = sbr.rel (%p298) target = $region52
        $region51: #{tpu_custom_call.1} parent=47 // pred_region
          %s301 = sand.u32 %s99, 1
          %s302 = scalar_lea.sflag [#allocation4], %s301
          %s303 = sand.u32 %s99, 1
          %s304 = smul.addr %s303, 32
          %s305 = scalar_lea.vmem [#allocation7], %s304
          %306 = dma.done %s302, 512
        $region52: #{tpu_custom_call.1} parent=47 // pred_fallthru
          _
      $region48: #{tpu_custom_call.1} parent=5 // pred_fallthru
        _
    $region6: #{tpu_custom_call.1} parent=1 // loop_footer
      %s21 = sadd.s32 1, %s17
    $region7: #{tpu_custom_call.1} parent=1 // loop_footer_branch
      %16 = sbr.rel target = $region3
    $region8: #{tpu_custom_call.1} parent=1 // loop_exit
      _
    %307 = vsyncpa [#allocation3], 1
    %s308 = scalar_lea.sflag [#allocation3], 1
    %309 = vsyncpa %s308, 1
    %310 = vsyncpa [#allocation6], 1
    %s311 = scalar_lea.sflag [#allocation6], 1
    %312 = vsyncpa %s311, 1
    %313 = vsyncpa [#allocation4], 1
    %s314 = scalar_lea.sflag [#allocation4], 1
    %315 = vsyncpa %s314, 1

</llo_original>
